<compile_context>
chip_gen: v6e
topology: v6e:2x2x1
jax: 0.10.0
libtpu: 0.0.40
codegen_flags: <defaults>
</compile_context>

<pallas_src>
import jax
import jax.numpy as jnp
from jax.experimental import pallas as pl
from jax.experimental.pallas import tpu as pltpu

NEG_SLOPE = 0.01  # F.leaky_relu default
BN_EPS = 1e-5
_MIB = 1024 * 1024


def _leaky_relu(x):
    return jnp.where(x > 0, x, NEG_SLOPE * x)


def _round_up(x, m):
    return (x + m - 1) // m * m


def _vmem_capacity_bytes():
    """Physical VMEM per TensorCore (128 MiB on v5e/v6e, 64 MiB on v7x)."""
    try:
        cap = getattr(pltpu.get_tpu_info(), "vmem_capacity_bytes", None)
        if cap:
            return int(cap)
    except Exception:
        pass
    try:
        kind = jax.devices()[0].device_kind.lower()
        if any(t in kind for t in ("v5 lite", "v5e", "v5litepod", "v6", "trillium")):
            return 128 * _MIB
    except Exception:
        pass
    return 64 * _MIB  # conservative default: v7x per-TensorCore VMEM


def _plan_tiles(n, tile_override=None):
    """Pick (n_pad, tile_n, tile_k, vmem_limit, fused) for the row x K grid."""
    if tile_override is None and n <= 128:
        # Tiny graph: everything fits in VMEM -> single fused kernel, grid=(1,).
        # Pad nodes to a full 128 lane width so all loads/stores stay lane-dense.
        return dict(fused=True, n_pad=128, tile_n=128, tile_k=128,
                    vmem_limit=32 * _MIB)

    if _vmem_capacity_bytes() >= 100 * _MIB:       # v5e / v6e: 128 MiB VMEM
        tile_n_max, tile_k_max, vmem_limit = 512, 1024, 96 * _MIB
    else:                                          # v7x (64 MiB) / unknown chip
        tile_n_max, tile_k_max, vmem_limit = 256, 1024, 48 * _MIB
    if tile_override is not None:
        tile_n_max, tile_k_max = tile_override

    num_k = -(-n // tile_k_max)                    # ceil-div: number of K steps
    tile_k = _round_up(-(-n // num_k), 128)        # per-K-step width (lane multiple)
    n_pad = num_k * tile_k                         # multiple of 128 and of tile_k

    tile_n = min(tile_n_max, n_pad)
    while n_pad % tile_n:                          # largest 128-multiple divisor
        tile_n -= 128
    if n_pad // tile_n < 2 and n_pad >= 256:
        tile_n = n_pad // 2                        # keep both v7x TensorCores busy
    return dict(fused=False, n_pad=n_pad, tile_n=tile_n, tile_k=tile_k,
                vmem_limit=vmem_limit)


# ---------------------------------------------------------------------------
# Pallas kernels
# ---------------------------------------------------------------------------
def gcn_hop1_kernel(a_ref, xw_ref, b1_ref, w2_ref, g_ref, acc_ref):
    """Row tile of G = relu(A @ (X W1) + b1) @ W2, K-tiled over the node dim."""
    k = pl.program_id(1)

    @pl.when(k == 0)
    def _():
        acc_ref[...] = jnp.zeros_like(acc_ref)

    acc_ref[...] += jnp.dot(a_ref[...], xw_ref[...],
                            preferred_element_type=jnp.float32)

    @pl.when(k == pl.num_programs(1) - 1)
    def _():
        h = jnp.maximum(acc_ref[...] + b1_ref[...], 0.0)
        g_ref[...] = jnp.dot(h.astype(jnp.bfloat16), w2_ref[...],
                             preferred_element_type=jnp.float32).astype(g_ref.dtype)


def gcn_hop2_tail_kernel(a_ref, g_ref, b2_ref, wf1_ref, bf1_ref, wf2_ref, bf2_ref,
                         out_ref, acc_ref):
    """Row tile of out = leaky(leaky(A @ G + b2) @ wf1' + bf1') @ wf2 + bf2.

    Eval-mode BatchNorm1d (running stats) is pre-folded into wf1'/bf1' on the
    host; dropout(p=0.2) is identity in eval mode. K-tiled with f32 accumulator.
    """
    k = pl.program_id(1)

    @pl.when(k == 0)
    def _():
        acc_ref[...] = jnp.zeros_like(acc_ref)

    acc_ref[...] += jnp.dot(a_ref[...], g_ref[...],
                            preferred_element_type=jnp.float32)

    @pl.when(k == pl.num_programs(1) - 1)
    def _():
        h2 = _leaky_relu(acc_ref[...] + b2_ref[...])
        h3 = jnp.dot(h2.astype(jnp.bfloat16), wf1_ref[...],
                     preferred_element_type=jnp.float32) + bf1_ref[...]
        h3 = _leaky_relu(h3)
        out_ref[...] = (jnp.dot(h3.astype(jnp.bfloat16), wf2_ref[...],
                                preferred_element_type=jnp.float32) + bf2_ref[...])


def fused_small_kernel(a_ref, xw_ref, b1_ref, w2_ref, b2_ref,
                       wf1_ref, bf1_ref, wf2_ref, bf2_ref, out_ref):
    """Whole forward for n_pad <= 128: hop1 + hop2 + fc tail in a single launch."""
    a = a_ref[...]
    h = jnp.dot(a, xw_ref[...], preferred_element_type=jnp.float32)
    h = jnp.maximum(h + b1_ref[...], 0.0)
    g = jnp.dot(h.astype(jnp.bfloat16), w2_ref[...],
                preferred_element_type=jnp.float32)
    h2 = jnp.dot(a, g.astype(jnp.bfloat16),
                 preferred_element_type=jnp.float32) + b2_ref[...]
    h2 = _leaky_relu(h2)
    h3 = jnp.dot(h2.astype(jnp.bfloat16), wf1_ref[...],
                 preferred_element_type=jnp.float32) + bf1_ref[...]
    h3 = _leaky_relu(h3)
    out_ref[...] = (jnp.dot(h3.astype(jnp.bfloat16), wf2_ref[...],
                            preferred_element_type=jnp.float32) + bf2_ref[...])


# ---------------------------------------------------------------------------
# Host-side glue
# ---------------------------------------------------------------------------
def build_normalized_adjacency(edge_index, num_nodes):
    """Dense A_hat = D^-1/2 (A + I) D^-1/2 (GCNConv gcn_norm; duplicates counted)."""
    # TODO(synk): for large sparse graphs, replace the dense N^2 materialization
    # with a PrefetchScalarGridSpec row-gather over the edge list.
    src, dst = edge_index[0], edge_index[1]
    a = jnp.zeros((num_nodes, num_nodes), jnp.float32)
    a = a.at[dst, src].add(1.0)                     # duplicate edges counted (PyG add-agg)
    a = a + jnp.eye(num_nodes, dtype=jnp.float32)   # self-loops
    deg = jnp.sum(a, axis=1)
    dinv = jnp.where(deg > 0, jax.lax.rsqrt(deg), 0.0)
    return dinv[:, None] * a * dinv[None, :]


def _pad2(x, rows, cols):
    return jnp.pad(x, ((0, rows - x.shape[0]), (0, cols - x.shape[1])))


def model_deep_forward(x, edge_index, params, tile_override=None):
    n, _ = x.shape
    hidden = params["w1"].shape[1]
    emb = params["w2"].shape[1]
    fc1 = params["wf1"].shape[1]      # 10
    out_dim = params["wf2"].shape[1]  # 5

    plan = _plan_tiles(n, tile_override)
    n_pad, tile_n, tile_k = plan["n_pad"], plan["tile_n"], plan["tile_k"]
    HID_P = _round_up(hidden, 128)
    EMB_P = _round_up(emb, 128)
    FC1_P = _round_up(fc1, 128)
    OUT_P = _round_up(out_dim, 128)   # lane-dense output; sliced to out_dim below

    # --- dense normalized adjacency, bf16 (halves HBM traffic, full MXU rate) ---
    a_hat = build_normalized_adjacency(edge_index, n)
    a_pad = _pad2(a_hat, n_pad, n_pad).astype(jnp.bfloat16)

    # --- hoisted feature-side projection X @ W1 (tiny, once, plain XLA) ---
    w1p = _pad2(params["w1"], params["w1"].shape[0], HID_P)
    xw1 = _pad2(x @ w1p, n_pad, HID_P).astype(jnp.bfloat16)
    b1p = _pad2(params["b1"], 1, HID_P)
    w2p = _pad2(params["w2"], HID_P, EMB_P).astype(jnp.bfloat16)
    b2p = _pad2(params["b2"], 1, EMB_P)

    # --- fold eval-mode BatchNorm1d into fc_block1; bf16 weights, f32 biases ---
    scale = params["gamma"] * jax.lax.rsqrt(params["var"] + BN_EPS)   # [1, emb]
    shift = params["beta"] - params["mean"] * scale                   # [1, emb]
    wf1p = _pad2(scale.reshape(emb, 1) * params["wf1"], EMB_P, FC1_P).astype(jnp.bfloat16)
    bf1p = _pad2(params["bf1"] + shift @ params["wf1"], 1, FC1_P)
    wf2p = _pad2(params["wf2"], FC1_P, OUT_P).astype(jnp.bfloat16)
    bf2p = _pad2(params["bf2"], 1, OUT_P)

    if plan["fused"]:
        # Small-N path: one launch, G never round-trips through HBM.
        full = lambda r, c: pl.BlockSpec((r, c), lambda i: (0, 0))
        out_pad = pl.pallas_call(
            fused_small_kernel,
            out_shape=jax.ShapeDtypeStruct((n_pad, OUT_P), jnp.float32),
            grid=(1,),
            in_specs=[
                full(n_pad, n_pad), full(n_pad, HID_P), full(1, HID_P),
                full(HID_P, EMB_P), full(1, EMB_P), full(EMB_P, FC1_P),
                full(1, FC1_P), full(FC1_P, OUT_P), full(1, OUT_P),
            ],
            out_specs=full(n_pad, OUT_P),
            compiler_params=pltpu.CompilerParams(
                dimension_semantics=("arbitrary",),
                vmem_limit_bytes=plan["vmem_limit"]),
        )(a_pad, xw1, b1p, w2p, b2p, wf1p, bf1p, wf2p, bf2p)
        return out_pad[:n, :out_dim]

    # --- K-tiled two-call path (rows parallel, K/contraction axis last) ---
    grid = (n_pad // tile_n, n_pad // tile_k)
    cparams = pltpu.CompilerParams(
        dimension_semantics=("parallel", "arbitrary"),
        vmem_limit_bytes=plan["vmem_limit"])
    a_spec = pl.BlockSpec((tile_n, tile_k), lambda i, k: (i, k))
    const = lambda r, c: pl.BlockSpec((r, c), lambda i, k: (0, 0))

    # hop 1: G = relu(A @ XW1 + b1) @ W2
    cost1 = pl.CostEstimate(
        flops=2 * n_pad * n_pad * HID_P + 2 * n_pad * HID_P * EMB_P,
        transcendentals=0,
        bytes_accessed=2 * n_pad * n_pad + 2 * grid[0] * n_pad * HID_P
        + 2 * n_pad * EMB_P)
    g = pl.pallas_call(
        gcn_hop1_kernel,
        out_shape=jax.ShapeDtypeStruct((n_pad, EMB_P), jnp.bfloat16),
        grid=grid,
        in_specs=[
            a_spec,
            pl.BlockSpec((tile_k, HID_P), lambda i, k: (k, 0)),
            const(1, HID_P),
            const(HID_P, EMB_P),
        ],
        out_specs=pl.BlockSpec((tile_n, EMB_P), lambda i, k: (i, 0)),
        scratch_shapes=[pltpu.VMEM((tile_n, HID_P), jnp.float32)],
        compiler_params=cparams,
        cost_estimate=cost1,
    )(a_pad, xw1, b1p, w2p)

    # hop 2 + folded-BN fc tail
    cost2 = pl.CostEstimate(
        flops=2 * n_pad * n_pad * EMB_P + 2 * n_pad * EMB_P * FC1_P
        + 2 * n_pad * FC1_P * OUT_P,
        transcendentals=0,
        bytes_accessed=2 * n_pad * n_pad + 2 * grid[0] * n_pad * EMB_P
        + 4 * n_pad * OUT_P)
    out_pad = pl.pallas_call(
        gcn_hop2_tail_kernel,
        out_shape=jax.ShapeDtypeStruct((n_pad, OUT_P), jnp.float32),
        grid=grid,
        in_specs=[
            a_spec,
            pl.BlockSpec((tile_k, EMB_P), lambda i, k: (k, 0)),
            const(1, EMB_P),
            const(EMB_P, FC1_P),
            const(1, FC1_P),
            const(FC1_P, OUT_P),
            const(1, OUT_P),
        ],
        out_specs=pl.BlockSpec((tile_n, OUT_P), lambda i, k: (i, 0)),
        scratch_shapes=[pltpu.VMEM((tile_n, EMB_P), jnp.float32)],
        compiler_params=cparams,
        cost_estimate=cost2,
    )(a_pad, g, b2p, wf1p, bf1p, wf2p, bf2p)

    return out_pad[:n, :out_dim]


def init_params(key, num_node_features, embedding_size, hidden_layers):
    ks = jax.random.split(key, 8)

    def glorot(k, fan_in, fan_out):
        limit = jnp.sqrt(6.0 / (fan_in + fan_out))
        return jax.random.uniform(k, (fan_in, fan_out), jnp.float32, -limit, limit)

    return {
        # GCNConv 1: num_node_features -> hidden_layers
        "w1": glorot(ks[0], num_node_features, hidden_layers),
        "b1": jnp.zeros((1, hidden_layers), jnp.float32),
        # GCNConv 2: hidden_layers -> embedding_size
        "w2": glorot(ks[1], hidden_layers, embedding_size),
        "b2": jnp.zeros((1, embedding_size), jnp.float32),
        # BatchNorm1d(embedding_size) — eval-mode running stats
        "gamma": jnp.ones((1, embedding_size), jnp.float32),
        "beta": jnp.zeros((1, embedding_size), jnp.float32),
        "mean": 0.05 * jax.random.normal(ks[2], (1, embedding_size), jnp.float32),
        "var": jnp.ones((1, embedding_size), jnp.float32)
               + 0.05 * jax.random.uniform(ks[3], (1, embedding_size), jnp.float32),
        # fc_block1: embedding_size -> 10
        "wf1": glorot(ks[4], embedding_size, 10),
        "bf1": 0.01 * jax.random.normal(ks[5], (1, 10), jnp.float32),
        # fc_block2: 10 -> 5
        "wf2": glorot(ks[6], 10, 5),
        "bf2": 0.01 * jax.random.normal(ks[7], (1, 5), jnp.float32),
    }


if __name__ == "__main__":
    num_node_features = 8
    hidden_layers = 16
    embedding_size = 32

    key = jax.random.PRNGKey(0)
    k1, k2, k3, k4, k5 = jax.random.split(key, 5)
    params = init_params(k5, num_node_features, embedding_size, hidden_layers)

    # f32 plain-JAX reference (bf16 A/activations in the kernels -> loosened tol)
    def reference(x, edge_index):
        a_hat = build_normalized_adjacency(edge_index, x.shape[0])
        h = jnp.maximum(a_hat @ (x @ params["w1"]) + params["b1"], 0.0)
        h2 = a_hat @ (h @ params["w2"]) + params["b2"]
        h2 = jnp.where(h2 > 0, h2, NEG_SLOPE * h2)
        h2 = ((h2 - params["mean"]) * jax.lax.rsqrt(params["var"] + BN_EPS)
              * params["gamma"] + params["beta"])
        h3 = h2 @ params["wf1"] + params["bf1"]
        h3 = jnp.where(h3 > 0, h3, NEG_SLOPE * h3)
        return h3 @ params["wf2"] + params["bf2"]

    # TODO(synk): training-mode dropout (pltpu.prng_random_bits mask) not implemented;
    # this is the eval-mode forward (dropout = identity, BN = running stats).

    # --- case 1: small graph -> single fused kernel (n_pad=128, grid=(1,)) ---
    n_s, e_s = 16, 40
    x_s = jax.random.normal(k1, (n_s, num_node_features), jnp.float32)
    ei_s = jax.random.randint(k2, (2, e_s), 0, n_s, jnp.int32)
    out_s = jax.block_until_ready(model_deep_forward(x_s, ei_s, params))
    ref_s = reference(x_s, ei_s)
    assert out_s.shape == (n_s, 5)
    assert jnp.allclose(out_s, ref_s, atol=5e-2, rtol=5e-2), (
        f"small-path max abs diff = {jnp.max(jnp.abs(out_s - ref_s))}")

    # --- case 2: larger graph with forced small tiles -> exercises the K-tiled
    #     accumulating path (3 row tiles x 3 K steps) at test-friendly shapes ---
    n_b, e_b = 384, 1200
    x_b = jax.random.normal(k3, (n_b, num_node_features), jnp.float32)
    ei_b = jax.random.randint(k4, (2, e_b), 0, n_b, jnp.int32)
    out_b = jax.block_until_ready(
        model_deep_forward(x_b, ei_b, params, tile_override=(128, 128)))
    ref_b = reference(x_b, ei_b)
    assert out_b.shape == (n_b, 5)
    assert jnp.allclose(out_b, ref_b, atol=5e-2, rtol=5e-2), (
        f"tiled-path max abs diff = {jnp.max(jnp.abs(out_b - ref_b))}")

    print("KERNEL_OK")
</pallas_src>

<mosaic_0001>
module attributes {stable_mosaic.version = 11 : i64} {
  func.func @fused_small_kernel(%arg0: i32, %arg1: memref<128x128xbf16, #tpu.memory_space<vmem>>, %arg2: memref<128x128xbf16, #tpu.memory_space<vmem>>, %arg3: memref<1x128xf32, #tpu.memory_space<vmem>>, %arg4: memref<128x128xbf16, #tpu.memory_space<vmem>>, %arg5: memref<1x128xf32, #tpu.memory_space<vmem>>, %arg6: memref<128x128xbf16, #tpu.memory_space<vmem>>, %arg7: memref<1x128xf32, #tpu.memory_space<vmem>>, %arg8: memref<128x128xbf16, #tpu.memory_space<vmem>>, %arg9: memref<1x128xf32, #tpu.memory_space<vmem>>, %arg10: memref<128x128xf32, #tpu.memory_space<vmem>>) attributes {dimension_semantics = [#tpu.dimension_semantics<arbitrary>], iteration_bounds = array<i64: 1>, scalar_prefetch = 0 : i64, scratch_operands = 0 : i64, tpu.core_type = #tpu.core_type<tc>, window_params = [{pipeline_mode = #tpu.pipeline_mode<synchronous>, transform_indices = @transform_0, window_bounds = array<i64: 128, 128>}, {pipeline_mode = #tpu.pipeline_mode<synchronous>, transform_indices = @transform_1, window_bounds = array<i64: 128, 128>}, {pipeline_mode = #tpu.pipeline_mode<synchronous>, transform_indices = @transform_2, window_bounds = array<i64: 1, 128>}, {pipeline_mode = #tpu.pipeline_mode<synchronous>, transform_indices = @transform_3, window_bounds = array<i64: 128, 128>}, {pipeline_mode = #tpu.pipeline_mode<synchronous>, transform_indices = @transform_4, window_bounds = array<i64: 1, 128>}, {pipeline_mode = #tpu.pipeline_mode<synchronous>, transform_indices = @transform_5, window_bounds = array<i64: 128, 128>}, {pipeline_mode = #tpu.pipeline_mode<synchronous>, transform_indices = @transform_6, window_bounds = array<i64: 1, 128>}, {pipeline_mode = #tpu.pipeline_mode<synchronous>, transform_indices = @transform_7, window_bounds = array<i64: 128, 128>}, {pipeline_mode = #tpu.pipeline_mode<synchronous>, transform_indices = @transform_8, window_bounds = array<i64: 1, 128>}, {pipeline_mode = #tpu.pipeline_mode<synchronous>, transform_indices = @transform_9, window_bounds = array<i64: 128, 128>}]} {
    %c0 = arith.constant 0 : index
    %c0_0 = arith.constant 0 : index
    %0 = vector.load %arg1[%c0, %c0_0] : memref<128x128xbf16, #tpu.memory_space<vmem>>, vector<128x128xbf16>
    %c0_1 = arith.constant 0 : index
    %c0_2 = arith.constant 0 : index
    %1 = vector.load %arg2[%c0_1, %c0_2] : memref<128x128xbf16, #tpu.memory_space<vmem>>, vector<128x128xbf16>
    %cst = arith.constant dense<0.000000e+00> : vector<128x128xf32>
    %2 = tpu.matmul %0, %1, %cst {dimension_numbers = #tpu.dot_dimension_numbers<[1], [0], [0], [1], [0, 0, 1, 1], [], []>} : vector<128x128xbf16>, vector<128x128xbf16>, vector<128x128xf32> -> vector<128x128xf32>
    %c0_3 = arith.constant 0 : index
    %c0_4 = arith.constant 0 : index
    %3 = vector.load %arg3[%c0_3, %c0_4] : memref<1x128xf32, #tpu.memory_space<vmem>>, vector<1x128xf32>
    %4 = vector.broadcast %3 : vector<1x128xf32> to vector<128x128xf32>
    %5 = arith.addf %2, %4 : vector<128x128xf32>
    %cst_5 = arith.constant 0.000000e+00 : f32
    %6 = vector.broadcast %cst_5 : f32 to vector<128x128xf32>
    %7 = arith.maximumf %5, %6 : vector<128x128xf32>
    %8 = arith.truncf %7 : vector<128x128xf32> to vector<128x128xbf16>
    %c0_6 = arith.constant 0 : index
    %c0_7 = arith.constant 0 : index
    %9 = vector.load %arg4[%c0_6, %c0_7] : memref<128x128xbf16, #tpu.memory_space<vmem>>, vector<128x128xbf16>
    %cst_8 = arith.constant dense<0.000000e+00> : vector<128x128xf32>
    %10 = tpu.matmul %8, %9, %cst_8 {dimension_numbers = #tpu.dot_dimension_numbers<[1], [0], [0], [1], [0, 0, 1, 1], [], []>} : vector<128x128xbf16>, vector<128x128xbf16>, vector<128x128xf32> -> vector<128x128xf32>
    %11 = arith.truncf %10 : vector<128x128xf32> to vector<128x128xbf16>
    %cst_9 = arith.constant dense<0.000000e+00> : vector<128x128xf32>
    %12 = tpu.matmul %0, %11, %cst_9 {dimension_numbers = #tpu.dot_dimension_numbers<[1], [0], [0], [1], [0, 0, 1, 1], [], []>} : vector<128x128xbf16>, vector<128x128xbf16>, vector<128x128xf32> -> vector<128x128xf32>
    %c0_10 = arith.constant 0 : index
    %c0_11 = arith.constant 0 : index
    %13 = vector.load %arg5[%c0_10, %c0_11] : memref<1x128xf32, #tpu.memory_space<vmem>>, vector<1x128xf32>
    %14 = vector.broadcast %13 : vector<1x128xf32> to vector<128x128xf32>
    %15 = arith.addf %12, %14 : vector<128x128xf32>
    %cst_12 = arith.constant 0.000000e+00 : f32
    %16 = vector.broadcast %cst_12 : f32 to vector<128x128xf32>
    %17 = arith.cmpf ogt, %15, %16 : vector<128x128xf32>
    %cst_13 = arith.constant 0.00999999977 : f32
    %18 = vector.broadcast %cst_13 : f32 to vector<128x128xf32>
    %19 = arith.mulf %18, %15 : vector<128x128xf32>
    %20 = arith.select %17, %15, %19 : vector<128x128xi1>, vector<128x128xf32>
    %21 = arith.truncf %20 : vector<128x128xf32> to vector<128x128xbf16>
    %c0_14 = arith.constant 0 : index
    %c0_15 = arith.constant 0 : index
    %22 = vector.load %arg6[%c0_14, %c0_15] : memref<128x128xbf16, #tpu.memory_space<vmem>>, vector<128x128xbf16>
    %cst_16 = arith.constant dense<0.000000e+00> : vector<128x128xf32>
    %23 = tpu.matmul %21, %22, %cst_16 {dimension_numbers = #tpu.dot_dimension_numbers<[1], [0], [0], [1], [0, 0, 1, 1], [], []>} : vector<128x128xbf16>, vector<128x128xbf16>, vector<128x128xf32> -> vector<128x128xf32>
    %c0_17 = arith.constant 0 : index
    %c0_18 = arith.constant 0 : index
    %24 = vector.load %arg7[%c0_17, %c0_18] : memref<1x128xf32, #tpu.memory_space<vmem>>, vector<1x128xf32>
    %25 = vector.broadcast %24 : vector<1x128xf32> to vector<128x128xf32>
    %26 = arith.addf %23, %25 : vector<128x128xf32>
    %cst_19 = arith.constant 0.000000e+00 : f32
    %27 = vector.broadcast %cst_19 : f32 to vector<128x128xf32>
    %28 = arith.cmpf ogt, %26, %27 : vector<128x128xf32>
    %cst_20 = arith.constant 0.00999999977 : f32
    %29 = vector.broadcast %cst_20 : f32 to vector<128x128xf32>
    %30 = arith.mulf %29, %26 : vector<128x128xf32>
    %31 = arith.select %28, %26, %30 : vector<128x128xi1>, vector<128x128xf32>
    %32 = arith.truncf %31 : vector<128x128xf32> to vector<128x128xbf16>
    %c0_21 = arith.constant 0 : index
    %c0_22 = arith.constant 0 : index
    %33 = vector.load %arg8[%c0_21, %c0_22] : memref<128x128xbf16, #tpu.memory_space<vmem>>, vector<128x128xbf16>
    %cst_23 = arith.constant dense<0.000000e+00> : vector<128x128xf32>
    %34 = tpu.matmul %32, %33, %cst_23 {dimension_numbers = #tpu.dot_dimension_numbers<[1], [0], [0], [1], [0, 0, 1, 1], [], []>} : vector<128x128xbf16>, vector<128x128xbf16>, vector<128x128xf32> -> vector<128x128xf32>
    %c0_24 = arith.constant 0 : index
    %c0_25 = arith.constant 0 : index
    %35 = vector.load %arg9[%c0_24, %c0_25] : memref<1x128xf32, #tpu.memory_space<vmem>>, vector<1x128xf32>
    %36 = vector.broadcast %35 : vector<1x128xf32> to vector<128x128xf32>
    %37 = arith.addf %34, %36 : vector<128x128xf32>
    %c0_26 = arith.constant 0 : index
    %c0_27 = arith.constant 0 : index
    %38 = vector.load %arg10[%c0_26, %c0_27] : memref<128x128xf32, #tpu.memory_space<vmem>>, vector<128x128xf32>
    tpu.vector_store %arg10[%c0_26, %c0_27], %37 {strides = array<i32>} : memref<128x128xf32, #tpu.memory_space<vmem>>, vector<128x128xf32>,
    return
  }
  func.func @transform_0(%arg0: i32) -> (i32, i32) {
    %c0_i32 = arith.constant 0 : i32
    %c0_i32_0 = arith.constant 0 : i32
    %c0_i32_1 = arith.constant 0 : i32
    return %c0_i32, %c0_i32_0 : i32, i32
  }
  func.func @transform_1(%arg0: i32) -> (i32, i32) {
    %c0_i32 = arith.constant 0 : i32
    %c0_i32_0 = arith.constant 0 : i32
    %c0_i32_1 = arith.constant 0 : i32
    return %c0_i32, %c0_i32_0 : i32, i32
  }
  func.func @transform_2(%arg0: i32) -> (i32, i32) {
    %c0_i32 = arith.constant 0 : i32
    %c0_i32_0 = arith.constant 0 : i32
    %c0_i32_1 = arith.constant 0 : i32
    return %c0_i32, %c0_i32_0 : i32, i32
  }
  func.func @transform_3(%arg0: i32) -> (i32, i32) {
    %c0_i32 = arith.constant 0 : i32
    %c0_i32_0 = arith.constant 0 : i32
    %c0_i32_1 = arith.constant 0 : i32
    return %c0_i32, %c0_i32_0 : i32, i32
  }
  func.func @transform_4(%arg0: i32) -> (i32, i32) {
    %c0_i32 = arith.constant 0 : i32
    %c0_i32_0 = arith.constant 0 : i32
    %c0_i32_1 = arith.constant 0 : i32
    return %c0_i32, %c0_i32_0 : i32, i32
  }
  func.func @transform_5(%arg0: i32) -> (i32, i32) {
    %c0_i32 = arith.constant 0 : i32
    %c0_i32_0 = arith.constant 0 : i32
    %c0_i32_1 = arith.constant 0 : i32
    return %c0_i32, %c0_i32_0 : i32, i32
  }
  func.func @transform_6(%arg0: i32) -> (i32, i32) {
    %c0_i32 = arith.constant 0 : i32
    %c0_i32_0 = arith.constant 0 : i32
    %c0_i32_1 = arith.constant 0 : i32
    return %c0_i32, %c0_i32_0 : i32, i32
  }
  func.func @transform_7(%arg0: i32) -> (i32, i32) {
    %c0_i32 = arith.constant 0 : i32
    %c0_i32_0 = arith.constant 0 : i32
    %c0_i32_1 = arith.constant 0 : i32
    return %c0_i32, %c0_i32_0 : i32, i32
  }
  func.func @transform_8(%arg0: i32) -> (i32, i32) {
    %c0_i32 = arith.constant 0 : i32
    %c0_i32_0 = arith.constant 0 : i32
    %c0_i32_1 = arith.constant 0 : i32
    return %c0_i32, %c0_i32_0 : i32, i32
  }
  func.func @transform_9(%arg0: i32) -> (i32, i32) {
    %c0_i32 = arith.constant 0 : i32
    %c0_i32_0 = arith.constant 0 : i32
    %c0_i32_1 = arith.constant 0 : i32
    return %c0_i32, %c0_i32_0 : i32, i32
  }
}

</mosaic_0001>

<llo_original>
// kernel: tpu_custom_call.1
$region0: #{tpu_custom_call.1}
  #allocation0 [shape = 'u32[]', space=smem, size = 0x4, offset = 0x4, fixed_abs, tag = 'smem constant byte address 0x4 - core index']
  #allocation1 [shape = 'u32[144,128]{1,0:T(1,128)}', space=vmem, size = 0x12000, scoped, tag = 'internal scratch']
  %s0 = inlined_call_operand.hbm [shape: bf16[128,128], index: 0, kind: input, shape index: {}]
  %s1 = inlined_call_operand.hbm [shape: bf16[128,128], index: 1, kind: input, shape index: {}]
  %s2 = inlined_call_operand.vmem [shape: f32[1,128], index: 2, kind: input, shape index: {}]
  %s3 = inlined_call_operand.hbm [shape: bf16[128,128], index: 3, kind: input, shape index: {}]
  %s4 = inlined_call_operand.vmem [shape: f32[1,128], index: 4, kind: input, shape index: {}]
  %s5 = inlined_call_operand.hbm [shape: bf16[128,128], index: 5, kind: input, shape index: {}]
  %s6 = inlined_call_operand.vmem [shape: f32[1,128], index: 6, kind: input, shape index: {}]
  %s7 = inlined_call_operand.hbm [shape: bf16[128,128], index: 7, kind: input, shape index: {}]
  %s8 = inlined_call_operand.vmem [shape: f32[1,128], index: 8, kind: input, shape index: {}]
  %s9 = inlined_call_operand.hbm [shape: f32[128,128], index: 9, kind: output, shape index: {}]
  %s10 = sld [smem:[#allocation0]]
  $region66: #{tpu_custom_call.1} parent=0
    _
  %s12 = ssub.s32 1, %s10
  %s13 = scalar_select 0, %s12, %s10
  $region1: #{tpu_custom_call.1} parent=0
    #allocation2 [shape = 'u8[32768]{0}', space=vmem, size = 0x8000, scoped, tag = 'input window, operand 0, single buffered']
    #allocation3 [shape = 's32[1]{0}', space=sflag, size = 0x4, scoped, tag = 'scoped memory for tpu_custom_call.1']
    #allocation4 [shape = 's32[1]{0}', space=sflag, size = 0x4, scoped, tag = 'scoped memory for tpu_custom_call.1']
    #allocation5 [shape = 'u8[32768]{0}', space=vmem, size = 0x8000, scoped, tag = 'input window, operand 1, single buffered']
    #allocation6 [shape = 's32[1]{0}', space=sflag, size = 0x4, scoped, tag = 'scoped memory for tpu_custom_call.1']
    #allocation7 [shape = 'u8[32768]{0}', space=vmem, size = 0x8000, scoped, tag = 'input window, operand 3, single buffered']
    #allocation8 [shape = 'u8[32768]{0}', space=vmem, size = 0x8000, scoped, tag = 'input window, operand 5, single buffered']
    #allocation9 [shape = 's32[1]{0}', space=sflag, size = 0x4, scoped, tag = 'scoped memory for tpu_custom_call.1']
    #allocation10 [shape = 'u8[32768]{0}', space=vmem, size = 0x8000, scoped, tag = 'input window, operand 7, single buffered']
    #allocation11 [shape = 'u8[65536]{0}', space=vmem, size = 0x10000, scoped, tag = 'output window, operand 0, single buffered']
    %14 = vsyncpa [#allocation3], 0
    %15 = vsyncpa [#allocation6], 0
    %16 = vsyncpa [#allocation9], 0
    %17 = vsyncpa [#allocation4], 0
    // Predicated region
    $region2: #{tpu_custom_call.1} parent=1 // pred_check
      _
    $region3: #{tpu_custom_call.1} parent=1 // pred_check_branch
      %19 = sbr.rel (0) target = $region5
    $region4: #{tpu_custom_call.1} parent=1 // pred_region
      %s21 = ssub.s32 1024, 1024
      %22 = vsyncadd [#allocation3], %s21
      %s23 = sshll.u32 [#allocation2], 4
      %s24 = int_to_ptr.vmem [resolvable:$true] %s23
      %29 = dma.hbm_to_vmem [thread:$0]  %s0, 1024, %s24, [#allocation3], 64, 64, 4
    $region5: #{tpu_custom_call.1} parent=1 // pred_fallthru
      _
    // Predicated region
    $region6: #{tpu_custom_call.1} parent=1 // pred_check
      _
    $region7: #{tpu_custom_call.1} parent=1 // pred_check_branch
      %31 = sbr.rel (0) target = $region9
    $region8: #{tpu_custom_call.1} parent=1 // pred_region
      %s33 = ssub.s32 1024, 1024
      %34 = vsyncadd [#allocation6], %s33
      %s35 = sshll.u32 [#allocation5], 4
      %s36 = int_to_ptr.vmem [resolvable:$true] %s35
      %41 = dma.hbm_to_vmem [thread:$0]  %s1, 1024, %s36, [#allocation6], 64, 64, 4
    $region9: #{tpu_custom_call.1} parent=1 // pred_fallthru
      _
    // Predicated region
    $region10: #{tpu_custom_call.1} parent=1 // pred_check
      _
    $region11: #{tpu_custom_call.1} parent=1 // pred_check_branch
      %43 = sbr.rel (0) target = $region13
    $region12: #{tpu_custom_call.1} parent=1 // pred_region
      _
    $region13: #{tpu_custom_call.1} parent=1 // pred_fallthru
      _
    // Predicated region
    $region14: #{tpu_custom_call.1} parent=1 // pred_check
      _
    $region15: #{tpu_custom_call.1} parent=1 // pred_check_branch
      %45 = sbr.rel (0) target = $region17
    $region16: #{tpu_custom_call.1} parent=1 // pred_region
      %s47 = ssub.s32 1024, 1024
      %48 = vsyncadd [#allocation6], %s47
      %s49 = sshll.u32 [#allocation7], 4
      %s50 = int_to_ptr.vmem [resolvable:$true] %s49
      %55 = dma.hbm_to_vmem [thread:$0]  %s3, 1024, %s50, [#allocation6], 64, 64, 4
    $region17: #{tpu_custom_call.1} parent=1 // pred_fallthru
      _
    // Predicated region
    $region18: #{tpu_custom_call.1} parent=1 // pred_check
      _
    $region19: #{tpu_custom_call.1} parent=1 // pred_check_branch
      %57 = sbr.rel (0) target = $region21
    $region20: #{tpu_custom_call.1} parent=1 // pred_region
      _
    $region21: #{tpu_custom_call.1} parent=1 // pred_fallthru
      _
    // Predicated region
    $region22: #{tpu_custom_call.1} parent=1 // pred_check
      _
    $region23: #{tpu_custom_call.1} parent=1 // pred_check_branch
      %59 = sbr.rel (0) target = $region25
    $region24: #{tpu_custom_call.1} parent=1 // pred_region
      %s61 = ssub.s32 1024, 1024
      %62 = vsyncadd [#allocation9], %s61
      %s63 = sshll.u32 [#allocation8], 4
      %s64 = int_to_ptr.vmem [resolvable:$true] %s63
      %69 = dma.hbm_to_vmem [thread:$0]  %s5, 1024, %s64, [#allocation9], 64, 64, 4
    $region25: #{tpu_custom_call.1} parent=1 // pred_fallthru
      _
    // Predicated region
    $region26: #{tpu_custom_call.1} parent=1 // pred_check
      _
    $region27: #{tpu_custom_call.1} parent=1 // pred_check_branch
      %71 = sbr.rel (0) target = $region29
    $region28: #{tpu_custom_call.1} parent=1 // pred_region
      _
    $region29: #{tpu_custom_call.1} parent=1 // pred_fallthru
      _
    // Predicated region
    $region30: #{tpu_custom_call.1} parent=1 // pred_check
      _
    $region31: #{tpu_custom_call.1} parent=1 // pred_check_branch
      %73 = sbr.rel (0) target = $region33
    $region32: #{tpu_custom_call.1} parent=1 // pred_region
      %s75 = ssub.s32 1024, 1024
      %76 = vsyncadd [#allocation9], %s75
      %s77 = sshll.u32 [#allocation10], 4
      %s78 = int_to_ptr.vmem [resolvable:$true] %s77
      %83 = dma.hbm_to_vmem [thread:$0]  %s7, 1024, %s78, [#allocation9], 64, 64, 4
    $region33: #{tpu_custom_call.1} parent=1 // pred_fallthru
      _
    // Predicated region
    $region34: #{tpu_custom_call.1} parent=1 // pred_check
      _
    $region35: #{tpu_custom_call.1} parent=1 // pred_check_branch
      %85 = sbr.rel (0) target = $region37
    $region36: #{tpu_custom_call.1} parent=1 // pred_region
      _
    $region37: #{tpu_custom_call.1} parent=1 // pred_fallthru
      _
    // Predicated region
    $region38: #{tpu_custom_call.1} parent=1 // pred_check
      _
    $region39: #{tpu_custom_call.1} parent=1 // pred_check_branch
      %87 = sbr.rel (0) target = $region41
    $region40: #{tpu_custom_call.1} parent=1 // pred_region
      %88 = dma.done [#allocation3], 1024
    $region41: #{tpu_custom_call.1} parent=1 // pred_fallthru
      _
    // Predicated region
    $region42: #{tpu_custom_call.1} parent=1 // pred_check
      _
    $region43: #{tpu_custom_call.1} parent=1 // pred_check_branch
      %90 = sbr.rel (0) target = $region45
    $region44: #{tpu_custom_call.1} parent=1 // pred_region
      %91 = dma.done [#allocation6], 1024
    $region45: #{tpu_custom_call.1} parent=1 // pred_fallthru
      _
    // Predicated region
    $region46: #{tpu_custom_call.1} parent=1 // pred_check
      _
    $region47: #{tpu_custom_call.1} parent=1 // pred_check_branch
      %93 = sbr.rel (0) target = $region49
    $region48: #{tpu_custom_call.1} parent=1 // pred_region
      %94 = dma.done [#allocation6], 1024
    $region49: #{tpu_custom_call.1} parent=1 // pred_fallthru
      _
    // Predicated region
    $region50: #{tpu_custom_call.1} parent=1 // pred_check
      _
    $region51: #{tpu_custom_call.1} parent=1 // pred_check_branch
      %96 = sbr.rel (0) target = $region53
    $region52: #{tpu_custom_call.1} parent=1 // pred_region
      %97 = dma.done [#allocation9], 1024
    $region53: #{tpu_custom_call.1} parent=1 // pred_fallthru
      _
    // Predicated region
    $region54: #{tpu_custom_call.1} parent=1 // pred_check
      _
    $region55: #{tpu_custom_call.1} parent=1 // pred_check_branch
      %99 = sbr.rel (0) target = $region57
    $region56: #{tpu_custom_call.1} parent=1 // pred_region
      %100 = dma.done [#allocation9], 1024
    $region57: #{tpu_custom_call.1} parent=1 // pred_fallthru
      _
    %v102 = vld [vmem:[#allocation2] sm:$0xf]
    %v103 = vld [vmem:[#allocation2 + $0x4] sm:$0xf]
    %v104 = vld [vmem:[#allocation2 + $0x8] sm:$0xf]
    %v105 = vld [vmem:[#allocation2 + $0xc] sm:$0xf]
    %v106 = vld [vmem:[#allocation2 + $0x10] sm:$0xf]
    %v107 = vld [vmem:[#allocation2 + $0x14] sm:$0xf]
    %v108 = vld [vmem:[#allocation2 + $0x18] sm:$0xf]
    %v109 = vld [vmem:[#allocation2 + $0x1c] sm:$0xf]
    %v110 = vld [vmem:[#allocation2 + $0x20] sm:$0xf]
    %v111 = vld [vmem:[#allocation2 + $0x24] sm:$0xf]
    %v112 = vld [vmem:[#allocation2 + $0x28] sm:$0xf]
    %v113 = vld [vmem:[#allocation2 + $0x2c] sm:$0xf]
    %v114 = vld [vmem:[#allocation2 + $0x30] sm:$0xf]
    %v115 = vld [vmem:[#allocation2 + $0x34] sm:$0xf]
    %v116 = vld [vmem:[#allocation2 + $0x38] sm:$0xf]
    %v117 = vld [vmem:[#allocation2 + $0x3c] sm:$0xf]
    %v118 = vld [vmem:[#allocation5] sm:$0xf]
    %v119 = vld [vmem:[#allocation5 + $0x4] sm:$0xf]
    %v120 = vld [vmem:[#allocation5 + $0x8] sm:$0xf]
    %v121 = vld [vmem:[#allocation5 + $0xc] sm:$0xf]
    %v122 = vld [vmem:[#allocation5 + $0x10] sm:$0xf]
    %v123 = vld [vmem:[#allocation5 + $0x14] sm:$0xf]
    %v124 = vld [vmem:[#allocation5 + $0x18] sm:$0xf]
    %v125 = vld [vmem:[#allocation5 + $0x1c] sm:$0xf]
    %v126 = vld [vmem:[#allocation5 + $0x20] sm:$0xf]
    %v127 = vld [vmem:[#allocation5 + $0x24] sm:$0xf]
    %v128 = vld [vmem:[#allocation5 + $0x28] sm:$0xf]
    %v129 = vld [vmem:[#allocation5 + $0x2c] sm:$0xf]
    %v130 = vld [vmem:[#allocation5 + $0x30] sm:$0xf]
    %v131 = vld [vmem:[#allocation5 + $0x34] sm:$0xf]
    %v132 = vld [vmem:[#allocation5 + $0x38] sm:$0xf]
    %v133 = vld [vmem:[#allocation5 + $0x3c] sm:$0xf]
    %v134 = vld [vmem:[%s2] sm:$0x1]
    %v136 = vlaneseq
    %v137 = vshrl.u32 %v136, 7
    %v138 = vsub.s32 0, %v137
    %v139 = vrot.slane %v134, %v138
    %v157 = vunpack.c.l.b16 %v102
    %v158 = vunpack.c.l.b16 %v103
    %v159 = vunpack.c.l.b16 %v104
    %v160 = vunpack.c.l.b16 %v105
    %v161 = vunpack.c.l.b16 %v106
    %v162 = vunpack.c.l.b16 %v107
    %v163 = vunpack.c.l.b16 %v108
    %v164 = vunpack.c.l.b16 %v109
    %v165 = vunpack.c.l.b16 %v110
    %v166 = vunpack.c.l.b16 %v111
    %v167 = vunpack.c.l.b16 %v112
    %v168 = vunpack.c.l.b16 %v113
    %v169 = vunpack.c.l.b16 %v114
    %v170 = vunpack.c.l.b16 %v115
    %v171 = vunpack.c.l.b16 %v116
    %v172 = vunpack.c.l.b16 %v117
    %v173 = vpack.c.b16 %v158, %v157
    %v174 = vpack.c.b16 %v160, %v159
    %v175 = vpack.c.b16 %v162, %v161
    %v176 = vpack.c.b16 %v164, %v163
    %v177 = vpack.c.b16 %v166, %v165
    %v178 = vpack.c.b16 %v168, %v167
    %v179 = vpack.c.b16 %v170, %v169
    %v180 = vpack.c.b16 %v172, %v171
    %v205 = vunpack.c.l.b16 %v118
    %v206 = vunpack.c.l.b16 %v119
    %v207 = vunpack.c.l.b16 %v120
    %v208 = vunpack.c.l.b16 %v121
    %v209 = vunpack.c.l.b16 %v122
    %v210 = vunpack.c.l.b16 %v123
    %v211 = vunpack.c.l.b16 %v124
    %v212 = vunpack.c.l.b16 %v125
    %v213 = vunpack.c.l.b16 %v126
    %v214 = vunpack.c.l.b16 %v127
    %v215 = vunpack.c.l.b16 %v128
    %v216 = vunpack.c.l.b16 %v129
    %v217 = vunpack.c.l.b16 %v130
    %v218 = vunpack.c.l.b16 %v131
    %v219 = vunpack.c.l.b16 %v132
    %v220 = vunpack.c.l.b16 %v133
    %v221 = vpack.c.b16 %v206, %v205
    %v222 = vpack.c.b16 %v208, %v207
    %v223 = vpack.c.b16 %v210, %v209
    %v224 = vpack.c.b16 %v212, %v211
    %v225 = vpack.c.b16 %v214, %v213
    %v226 = vpack.c.b16 %v216, %v215
    %v227 = vpack.c.b16 %v218, %v217
    %v228 = vpack.c.b16 %v220, %v219
    %237 = vmatprep.subr.bf16.mxu0 0
    %238 = vmatpush1.bf16.msra.mxu0 %v228
    %239 = vmatprep.subr.bf16.mxu0 0
    %240 = vmatpush1.bf16.msra.mxu0 %v227
    %241 = vmatprep.subr.bf16.mxu0 0
    %242 = vmatpush1.bf16.msra.mxu0 %v226
    %243 = vmatprep.subr.bf16.mxu0 0
    %244 = vmatpush1.bf16.msra.mxu0 %v225
    %245 = vmatprep.subr.bf16.mxu0 0
    %246 = vmatpush1.bf16.msra.mxu0 %v224
    %247 = vmatprep.subr.bf16.mxu0 0
    %248 = vmatpush1.bf16.msra.mxu0 %v223
    %249 = vmatprep.subr.bf16.mxu0 0
    %250 = vmatpush1.bf16.msra.mxu0 %v222
    %251 = vmatprep.subr.bf16.mxu0 0
    %252 = vmatpush1.bf16.msra.mxu0 %v221
    %253 = vmatprep.subr.bf16.mxu0 0
    %254 = vmatpush2.bf16.msra.mxu0 0
    %255 = vmatprep.subr.bf16.mxu0 0
    %256 = vmatpush2.bf16.msra.mxu0 0
    %257 = vmatprep.subr.bf16.mxu0 0
    %258 = vmatpush2.bf16.msra.mxu0 0
    %259 = vmatprep.subr.bf16.mxu0 0
    %260 = vmatpush2.bf16.msra.mxu0 0
    %261 = vmatprep.subr.bf16.mxu0 0
    %262 = vmatpush2.bf16.msra.mxu0 0
    %263 = vmatprep.subr.bf16.mxu0 0
    %264 = vmatpush2.bf16.msra.mxu0 0
    %265 = vmatprep.subr.bf16.mxu0 0
    %266 = vmatpush2.bf16.msra.mxu0 0
    %267 = vmatprep.subr.bf16.mxu0 0
    %268 = vmatpush2.bf16.msra.mxu0 0
    %269 = vmatprep.mubr.bf16.mxu0 0
    %270 = vmatmul.mubr.bf16.gmra.mxu0 %v173
    %v271 = vpop.f32.mrf.mxu0
    %v272 = vadd.f32 %v139, %v271
    %v273 = vpop.f32.mrf.mxu0
    %v274 = vpop.f32.mrf.mxu0
    %v275 = vadd.f32 %v139, %v274
    %v276 = vpop.f32.mrf.mxu0
    %277 = vmatprep.mubr.bf16.mxu0 0
    %278 = vmatmul.mubr.bf16.gmra.mxu0 %v174
    %v279 = vpop.f32.mrf.mxu0
    %v280 = vadd.f32 %v139, %v279
    %v281 = vpop.f32.mrf.mxu0
    %v282 = vpop.f32.mrf.mxu0
    %v283 = vadd.f32 %v139, %v282
    %v284 = vpop.f32.mrf.mxu0
    %285 = vmatprep.mubr.bf16.mxu0 0
    %286 = vmatmul.mubr.bf16.gmra.mxu0 %v175
    %v287 = vpop.f32.mrf.mxu0
    %v288 = vadd.f32 %v139, %v287
    %v289 = vpop.f32.mrf.mxu0
    %v290 = vpop.f32.mrf.mxu0
    %v291 = vadd.f32 %v139, %v290
    %v292 = vpop.f32.mrf.mxu0
    %293 = vmatprep.mubr.bf16.mxu0 0
    %294 = vmatmul.mubr.bf16.gmra.mxu0 %v176
    %v295 = vpop.f32.mrf.mxu0
    %v296 = vadd.f32 %v139, %v295
    %v297 = vpop.f32.mrf.mxu0
    %v298 = vpop.f32.mrf.mxu0
    %v299 = vadd.f32 %v139, %v298
    %v300 = vpop.f32.mrf.mxu0
    %301 = vmatprep.mubr.bf16.mxu0 0
    %302 = vmatmul.mubr.bf16.gmra.mxu0 %v177
    %v303 = vpop.f32.mrf.mxu0
    %v304 = vadd.f32 %v139, %v303
    %v305 = vpop.f32.mrf.mxu0
    %v306 = vpop.f32.mrf.mxu0
    %v307 = vadd.f32 %v139, %v306
    %v308 = vpop.f32.mrf.mxu0
    %309 = vmatprep.mubr.bf16.mxu0 0
    %310 = vmatmul.mubr.bf16.gmra.mxu0 %v178
    %v311 = vpop.f32.mrf.mxu0
    %v312 = vadd.f32 %v139, %v311
    %v313 = vpop.f32.mrf.mxu0
    %v314 = vpop.f32.mrf.mxu0
    %v315 = vadd.f32 %v139, %v314
    %v316 = vpop.f32.mrf.mxu0
    %317 = vmatprep.mubr.bf16.mxu0 0
    %318 = vmatmul.mubr.bf16.gmra.mxu0 %v179
    %v319 = vpop.f32.mrf.mxu0
    %v320 = vadd.f32 %v139, %v319
    %v321 = vpop.f32.mrf.mxu0
    %v322 = vpop.f32.mrf.mxu0
    %v323 = vadd.f32 %v139, %v322
    %v324 = vpop.f32.mrf.mxu0
    %325 = vmatprep.mubr.bf16.mxu0 0
    %326 = vmatmul.mubr.bf16.gmra.mxu0 %v180
    %v327 = vpop.f32.mrf.mxu0
    %v328 = vadd.f32 %v139, %v327
    %v329 = vpop.f32.mrf.mxu0
    %v330 = vpop.f32.mrf.mxu0
    %v331 = vadd.f32 %v139, %v330
    %v332 = vpop.f32.mrf.mxu0
    %333 = vdwg.mxu0
    %v334 = vmax.f32 %v272, 0.0
    %v335 = vmax.f32 %v275, 0.0
    %v336 = vmax.f32 %v280, 0.0
    %v337 = vmax.f32 %v283, 0.0
    %v338 = vmax.f32 %v288, 0.0
    %v339 = vmax.f32 %v291, 0.0
    %v340 = vmax.f32 %v296, 0.0
    %v341 = vmax.f32 %v299, 0.0
    %v342 = vmax.f32 %v304, 0.0
    %v343 = vmax.f32 %v307, 0.0
    %v344 = vmax.f32 %v312, 0.0
    %v345 = vmax.f32 %v315, 0.0
    %v346 = vmax.f32 %v320, 0.0
    %v347 = vmax.f32 %v323, 0.0
    %v348 = vmax.f32 %v328, 0.0
    %v349 = vmax.f32 %v331, 0.0
    %v350 = vpack.c.bf16 %v335, %v334
    %v351 = vpack.c.bf16 %v337, %v336
    %v352 = vpack.c.bf16 %v339, %v338
    %v353 = vpack.c.bf16 %v341, %v340
    %v354 = vpack.c.bf16 %v343, %v342
    %v355 = vpack.c.bf16 %v345, %v344
    %v356 = vpack.c.bf16 %v347, %v346
    %v357 = vpack.c.bf16 %v349, %v348
    %v358 = vld [vmem:[#allocation7] sm:$0xf]
    %v359 = vld [vmem:[#allocation7 + $0x4] sm:$0xf]
    %v360 = vld [vmem:[#allocation7 + $0x8] sm:$0xf]
    %v361 = vld [vmem:[#allocation7 + $0xc] sm:$0xf]
    %v362 = vld [vmem:[#allocation7 + $0x10] sm:$0xf]
    %v363 = vld [vmem:[#allocation7 + $0x14] sm:$0xf]
    %v364 = vld [vmem:[#allocation7 + $0x18] sm:$0xf]
    %v365 = vld [vmem:[#allocation7 + $0x1c] sm:$0xf]
    %v366 = vld [vmem:[#allocation7 + $0x20] sm:$0xf]
    %v367 = vld [vmem:[#allocation7 + $0x24] sm:$0xf]
    %v368 = vld [vmem:[#allocation7 + $0x28] sm:$0xf]
    %v369 = vld [vmem:[#allocation7 + $0x2c] sm:$0xf]
    %v370 = vld [vmem:[#allocation7 + $0x30] sm:$0xf]
    %v371 = vld [vmem:[#allocation7 + $0x34] sm:$0xf]
    %v372 = vld [vmem:[#allocation7 + $0x38] sm:$0xf]
    %v373 = vld [vmem:[#allocation7 + $0x3c] sm:$0xf]
    %v390 = vunpack.c.l.b16 %v358
    %v391 = vunpack.c.l.b16 %v359
    %v392 = vunpack.c.l.b16 %v360
    %v393 = vunpack.c.l.b16 %v361
    %v394 = vunpack.c.l.b16 %v362
    %v395 = vunpack.c.l.b16 %v363
    %v396 = vunpack.c.l.b16 %v364
    %v397 = vunpack.c.l.b16 %v365
    %v398 = vunpack.c.l.b16 %v366
    %v399 = vunpack.c.l.b16 %v367
    %v400 = vunpack.c.l.b16 %v368
    %v401 = vunpack.c.l.b16 %v369
    %v402 = vunpack.c.l.b16 %v370
    %v403 = vunpack.c.l.b16 %v371
    %v404 = vunpack.c.l.b16 %v372
    %v405 = vunpack.c.l.b16 %v373
    %v406 = vpack.c.b16 %v391, %v390
    %v407 = vpack.c.b16 %v393, %v392
    %v408 = vpack.c.b16 %v395, %v394
    %v409 = vpack.c.b16 %v397, %v396
    %v410 = vpack.c.b16 %v399, %v398
    %v411 = vpack.c.b16 %v401, %v400
    %v412 = vpack.c.b16 %v403, %v402
    %v413 = vpack.c.b16 %v405, %v404
    %422 = vmatprep.subr.bf16.mxu0 0
    %423 = vmatpush1.bf16.msra.mxu0 %v413
    %424 = vmatprep.subr.bf16.mxu0 0
    %425 = vmatpush1.bf16.msra.mxu0 %v412
    %426 = vmatprep.subr.bf16.mxu0 0
    %427 = vmatpush1.bf16.msra.mxu0 %v411
    %428 = vmatprep.subr.bf16.mxu0 0
    %429 = vmatpush1.bf16.msra.mxu0 %v410
    %430 = vmatprep.subr.bf16.mxu0 0
    %431 = vmatpush1.bf16.msra.mxu0 %v409
    %432 = vmatprep.subr.bf16.mxu0 0
    %433 = vmatpush1.bf16.msra.mxu0 %v408
    %434 = vmatprep.subr.bf16.mxu0 0
    %435 = vmatpush1.bf16.msra.mxu0 %v407
    %436 = vmatprep.subr.bf16.mxu0 0
    %437 = vmatpush1.bf16.msra.mxu0 %v406
    %438 = vmatprep.subr.bf16.mxu0 0
    %439 = vmatpush2.bf16.msra.mxu0 0
    %440 = vmatprep.subr.bf16.mxu0 0
    %441 = vmatpush2.bf16.msra.mxu0 0
    %442 = vmatprep.subr.bf16.mxu0 0
    %443 = vmatpush2.bf16.msra.mxu0 0
    %444 = vmatprep.subr.bf16.mxu0 0
    %445 = vmatpush2.bf16.msra.mxu0 0
    %446 = vmatprep.subr.bf16.mxu0 0
    %447 = vmatpush2.bf16.msra.mxu0 0
    %448 = vmatprep.subr.bf16.mxu0 0
    %449 = vmatpush2.bf16.msra.mxu0 0
    %450 = vmatprep.subr.bf16.mxu0 0
    %451 = vmatpush2.bf16.msra.mxu0 0
    %452 = vmatprep.subr.bf16.mxu0 0
    %453 = vmatpush2.bf16.msra.mxu0 0
    %454 = vmatprep.mubr.bf16.mxu0 0
    %455 = vmatmul.mubr.bf16.gmra.mxu0 %v350
    %v456 = vpop.f32.mrf.mxu0
    %v457 = vadd.f32 0.0, %v456
    %v458 = vpop.f32.mrf.mxu0
    %v459 = vpop.f32.mrf.mxu0
    %v460 = vadd.f32 0.0, %v459
    %v461 = vpop.f32.mrf.mxu0
    %462 = vmatprep.mubr.bf16.mxu0 0
    %463 = vmatmul.mubr.bf16.gmra.mxu0 %v351
    %v464 = vpop.f32.mrf.mxu0
    %v465 = vadd.f32 0.0, %v464
    %v466 = vpop.f32.mrf.mxu0
    %v467 = vpop.f32.mrf.mxu0
    %v468 = vadd.f32 0.0, %v467
    %v469 = vpop.f32.mrf.mxu0
    %470 = vmatprep.mubr.bf16.mxu0 0
    %471 = vmatmul.mubr.bf16.gmra.mxu0 %v352
    %v472 = vpop.f32.mrf.mxu0
    %v473 = vadd.f32 0.0, %v472
    %v474 = vpop.f32.mrf.mxu0
    %v475 = vpop.f32.mrf.mxu0
    %v476 = vadd.f32 0.0, %v475
    %v477 = vpop.f32.mrf.mxu0
    %478 = vmatprep.mubr.bf16.mxu0 0
    %479 = vmatmul.mubr.bf16.gmra.mxu0 %v353
    %v480 = vpop.f32.mrf.mxu0
    %v481 = vadd.f32 0.0, %v480
    %v482 = vpop.f32.mrf.mxu0
    %v483 = vpop.f32.mrf.mxu0
    %v484 = vadd.f32 0.0, %v483
    %v485 = vpop.f32.mrf.mxu0
    %486 = vmatprep.mubr.bf16.mxu0 0
    %487 = vmatmul.mubr.bf16.gmra.mxu0 %v354
    %v488 = vpop.f32.mrf.mxu0
    %v489 = vadd.f32 0.0, %v488
    %v490 = vpop.f32.mrf.mxu0
    %v491 = vpop.f32.mrf.mxu0
    %v492 = vadd.f32 0.0, %v491
    %v493 = vpop.f32.mrf.mxu0
    %494 = vmatprep.mubr.bf16.mxu0 0
    %495 = vmatmul.mubr.bf16.gmra.mxu0 %v355
    %v496 = vpop.f32.mrf.mxu0
    %v497 = vadd.f32 0.0, %v496
    %v498 = vpop.f32.mrf.mxu0
    %v499 = vpop.f32.mrf.mxu0
    %v500 = vadd.f32 0.0, %v499
    %v501 = vpop.f32.mrf.mxu0
    %502 = vmatprep.mubr.bf16.mxu0 0
    %503 = vmatmul.mubr.bf16.gmra.mxu0 %v356
    %v504 = vpop.f32.mrf.mxu0
    %v505 = vadd.f32 0.0, %v504
    %v506 = vpop.f32.mrf.mxu0
    %v507 = vpop.f32.mrf.mxu0
    %v508 = vadd.f32 0.0, %v507
    %v509 = vpop.f32.mrf.mxu0
    %510 = vmatprep.mubr.bf16.mxu0 0
    %511 = vmatmul.mubr.bf16.gmra.mxu0 %v357
    %v512 = vpop.f32.mrf.mxu0
    %v513 = vadd.f32 0.0, %v512
    %v514 = vpop.f32.mrf.mxu0
    %v515 = vpop.f32.mrf.mxu0
    %v516 = vadd.f32 0.0, %v515
    %v517 = vpop.f32.mrf.mxu0
    %518 = vdwg.mxu0
    %v519 = vpack.c.bf16 %v460, %v457
    %v520 = vpack.c.bf16 %v468, %v465
    %v521 = vpack.c.bf16 %v476, %v473
    %v522 = vpack.c.bf16 %v484, %v481
    %v523 = vpack.c.bf16 %v492, %v489
    %v524 = vpack.c.bf16 %v500, %v497
    %v525 = vpack.c.bf16 %v508, %v505
    %v526 = vpack.c.bf16 %v516, %v513
    %v527 = vld [vmem:[%s4] sm:$0x1]
    %v529 = vlaneseq
    %v530 = vshrl.u32 %v529, 7
    %v531 = vsub.s32 0, %v530
    %v532 = vrot.slane %v527, %v531
    %534 = vmatprep.subr.bf16.mxu0 0
    %535 = vmatpush1.bf16.msra.mxu0 %v526
    %536 = vmatprep.subr.bf16.mxu0 0
    %537 = vmatpush1.bf16.msra.mxu0 %v525
    %538 = vmatprep.subr.bf16.mxu0 0
    %539 = vmatpush1.bf16.msra.mxu0 %v524
    %540 = vmatprep.subr.bf16.mxu0 0
    %541 = vmatpush1.bf16.msra.mxu0 %v523
    %542 = vmatprep.subr.bf16.mxu0 0
    %543 = vmatpush1.bf16.msra.mxu0 %v522
    %544 = vmatprep.subr.bf16.mxu0 0
    %545 = vmatpush1.bf16.msra.mxu0 %v521
    %546 = vmatprep.subr.bf16.mxu0 0
    %547 = vmatpush1.bf16.msra.mxu0 %v520
    %548 = vmatprep.subr.bf16.mxu0 0
    %549 = vmatpush1.bf16.msra.mxu0 %v519
    %550 = vmatprep.subr.bf16.mxu0 0
    %551 = vmatpush2.bf16.msra.mxu0 0
    %552 = vmatprep.subr.bf16.mxu0 0
    %553 = vmatpush2.bf16.msra.mxu0 0
    %554 = vmatprep.subr.bf16.mxu0 0
    %555 = vmatpush2.bf16.msra.mxu0 0
    %556 = vmatprep.subr.bf16.mxu0 0
    %557 = vmatpush2.bf16.msra.mxu0 0
    %558 = vmatprep.subr.bf16.mxu0 0
    %559 = vmatpush2.bf16.msra.mxu0 0
    %560 = vmatprep.subr.bf16.mxu0 0
    %561 = vmatpush2.bf16.msra.mxu0 0
    %562 = vmatprep.subr.bf16.mxu0 0
    %563 = vmatpush2.bf16.msra.mxu0 0
    %564 = vmatprep.subr.bf16.mxu0 0
    %565 = vmatpush2.bf16.msra.mxu0 0
    %566 = vmatprep.mubr.bf16.mxu0 0
    %567 = vmatmul.mubr.bf16.gmra.mxu0 %v173
    %v568 = vpop.f32.mrf.mxu0
    %v569 = vadd.f32 %v532, %v568
    %v570 = vpop.f32.mrf.mxu0
    %v571 = vpop.f32.mrf.mxu0
    %v572 = vadd.f32 %v532, %v571
    %v573 = vpop.f32.mrf.mxu0
    %574 = vmatprep.mubr.bf16.mxu0 0
    %575 = vmatmul.mubr.bf16.gmra.mxu0 %v174
    %v576 = vpop.f32.mrf.mxu0
    %v577 = vadd.f32 %v532, %v576
    %v578 = vpop.f32.mrf.mxu0
    %v579 = vpop.f32.mrf.mxu0
    %v580 = vadd.f32 %v532, %v579
    %v581 = vpop.f32.mrf.mxu0
    %582 = vmatprep.mubr.bf16.mxu0 0
    %583 = vmatmul.mubr.bf16.gmra.mxu0 %v175
    %v584 = vpop.f32.mrf.mxu0
    %v585 = vadd.f32 %v532, %v584
    %v586 = vpop.f32.mrf.mxu0
    %v587 = vpop.f32.mrf.mxu0
    %v588 = vadd.f32 %v532, %v587
    %v589 = vpop.f32.mrf.mxu0
    %590 = vmatprep.mubr.bf16.mxu0 0
    %591 = vmatmul.mubr.bf16.gmra.mxu0 %v176
    %v592 = vpop.f32.mrf.mxu0
    %v593 = vadd.f32 %v532, %v592
    %v594 = vpop.f32.mrf.mxu0
    %v595 = vpop.f32.mrf.mxu0
    %v596 = vadd.f32 %v532, %v595
    %v597 = vpop.f32.mrf.mxu0
    %598 = vmatprep.mubr.bf16.mxu0 0
    %599 = vmatmul.mubr.bf16.gmra.mxu0 %v177
    %v600 = vpop.f32.mrf.mxu0
    %v601 = vadd.f32 %v532, %v600
    %v602 = vpop.f32.mrf.mxu0
    %v603 = vpop.f32.mrf.mxu0
    %v604 = vadd.f32 %v532, %v603
    %v605 = vpop.f32.mrf.mxu0
    %606 = vmatprep.mubr.bf16.mxu0 0
    %607 = vmatmul.mubr.bf16.gmra.mxu0 %v178
    %v608 = vpop.f32.mrf.mxu0
    %v609 = vadd.f32 %v532, %v608
    %v610 = vpop.f32.mrf.mxu0
    %v611 = vpop.f32.mrf.mxu0
    %v612 = vadd.f32 %v532, %v611
    %v613 = vpop.f32.mrf.mxu0
    %614 = vmatprep.mubr.bf16.mxu0 0
    %615 = vmatmul.mubr.bf16.gmra.mxu0 %v179
    %v616 = vpop.f32.mrf.mxu0
    %v617 = vadd.f32 %v532, %v616
    %v618 = vpop.f32.mrf.mxu0
    %v619 = vpop.f32.mrf.mxu0
    %v620 = vadd.f32 %v532, %v619
    %v621 = vpop.f32.mrf.mxu0
    %622 = vmatprep.mubr.bf16.mxu0 0
    %623 = vmatmul.mubr.bf16.gmra.mxu0 %v180
    %v624 = vpop.f32.mrf.mxu0
    %v625 = vadd.f32 %v532, %v624
    %v626 = vpop.f32.mrf.mxu0
    %v627 = vpop.f32.mrf.mxu0
    %v628 = vadd.f32 %v532, %v627
    %v629 = vpop.f32.mrf.mxu0
    %630 = vdwg.mxu0
    %vm631 = vcmp.gt.f32.partialorder %v569, 0.0
    %vm632 = vcmp.gt.f32.partialorder %v572, 0.0
    %vm633 = vcmp.gt.f32.partialorder %v577, 0.0
    %vm634 = vcmp.gt.f32.partialorder %v580, 0.0
    %vm635 = vcmp.gt.f32.partialorder %v585, 0.0
    %vm636 = vcmp.gt.f32.partialorder %v588, 0.0
    %vm637 = vcmp.gt.f32.partialorder %v593, 0.0
    %vm638 = vcmp.gt.f32.partialorder %v596, 0.0
    %vm639 = vcmp.gt.f32.partialorder %v601, 0.0
    %vm640 = vcmp.gt.f32.partialorder %v604, 0.0
    %vm641 = vcmp.gt.f32.partialorder %v609, 0.0
    %vm642 = vcmp.gt.f32.partialorder %v612, 0.0
    %vm643 = vcmp.gt.f32.partialorder %v617, 0.0
    %vm644 = vcmp.gt.f32.partialorder %v620, 0.0
    %vm645 = vcmp.gt.f32.partialorder %v625, 0.0
    %vm646 = vcmp.gt.f32.partialorder %v628, 0.0
    %v647 = vmul.f32 %v569, 0.01
    %v648 = vmul.f32 %v572, 0.01
    %v649 = vmul.f32 %v577, 0.01
    %v650 = vmul.f32 %v580, 0.01
    %v651 = vmul.f32 %v585, 0.01
    %v652 = vmul.f32 %v588, 0.01
    %v653 = vmul.f32 %v593, 0.01
    %v654 = vmul.f32 %v596, 0.01
    %v655 = vmul.f32 %v601, 0.01
    %v656 = vmul.f32 %v604, 0.01
    %v657 = vmul.f32 %v609, 0.01
    %v658 = vmul.f32 %v612, 0.01
    %v659 = vmul.f32 %v617, 0.01
    %v660 = vmul.f32 %v620, 0.01
    %v661 = vmul.f32 %v625, 0.01
    %v662 = vmul.f32 %v628, 0.01
    %v663 = vsel %vm631, %v569, %v647
    %v664 = vsel %vm632, %v572, %v648
    %v665 = vsel %vm633, %v577, %v649
    %v666 = vsel %vm634, %v580, %v650
    %v667 = vsel %vm635, %v585, %v651
    %v668 = vsel %vm636, %v588, %v652
    %v669 = vsel %vm637, %v593, %v653
    %v670 = vsel %vm638, %v596, %v654
    %v671 = vsel %vm639, %v601, %v655
    %v672 = vsel %vm640, %v604, %v656
    %v673 = vsel %vm641, %v609, %v657
    %v674 = vsel %vm642, %v612, %v658
    %v675 = vsel %vm643, %v617, %v659
    %v676 = vsel %vm644, %v620, %v660
    %v677 = vsel %vm645, %v625, %v661
    %v678 = vsel %vm646, %v628, %v662
    %v679 = vpack.c.bf16 %v664, %v663
    %v680 = vpack.c.bf16 %v666, %v665
    %v681 = vpack.c.bf16 %v668, %v667
    %v682 = vpack.c.bf16 %v670, %v669
    %v683 = vpack.c.bf16 %v672, %v671
    %v684 = vpack.c.bf16 %v674, %v673
    %v685 = vpack.c.bf16 %v676, %v675
    %v686 = vpack.c.bf16 %v678, %v677
    %v687 = vld [vmem:[#allocation8] sm:$0xf]
    %v688 = vld [vmem:[#allocation8 + $0x4] sm:$0xf]
    %v689 = vld [vmem:[#allocation8 + $0x8] sm:$0xf]
    %v690 = vld [vmem:[#allocation8 + $0xc] sm:$0xf]
    %v691 = vld [vmem:[#allocation8 + $0x10] sm:$0xf]
    %v692 = vld [vmem:[#allocation8 + $0x14] sm:$0xf]
    %v693 = vld [vmem:[#allocation8 + $0x18] sm:$0xf]
    %v694 = vld [vmem:[#allocation8 + $0x1c] sm:$0xf]
    %v695 = vld [vmem:[#allocation8 + $0x20] sm:$0xf]
    %v696 = vld [vmem:[#allocation8 + $0x24] sm:$0xf]
    %v697 = vld [vmem:[#allocation8 + $0x28] sm:$0xf]
    %v698 = vld [vmem:[#allocation8 + $0x2c] sm:$0xf]
    %v699 = vld [vmem:[#allocation8 + $0x30] sm:$0xf]
    %v700 = vld [vmem:[#allocation8 + $0x34] sm:$0xf]
    %v701 = vld [vmem:[#allocation8 + $0x38] sm:$0xf]
    %v702 = vld [vmem:[#allocation8 + $0x3c] sm:$0xf]
    %v703 = vld [vmem:[%s6] sm:$0x1]
    %v705 = vlaneseq
    %v706 = vshrl.u32 %v705, 7
    %v707 = vsub.s32 0, %v706
    %v708 = vrot.slane %v703, %v707
    %v726 = vunpack.c.l.b16 %v687
    %v727 = vunpack.c.l.b16 %v688
    %v728 = vunpack.c.l.b16 %v689
    %v729 = vunpack.c.l.b16 %v690
    %v730 = vunpack.c.l.b16 %v691
    %v731 = vunpack.c.l.b16 %v692
    %v732 = vunpack.c.l.b16 %v693
    %v733 = vunpack.c.l.b16 %v694
    %v734 = vunpack.c.l.b16 %v695
    %v735 = vunpack.c.l.b16 %v696
    %v736 = vunpack.c.l.b16 %v697
    %v737 = vunpack.c.l.b16 %v698
    %v738 = vunpack.c.l.b16 %v699
    %v739 = vunpack.c.l.b16 %v700
    %v740 = vunpack.c.l.b16 %v701
    %v741 = vunpack.c.l.b16 %v702
    %v742 = vpack.c.b16 %v727, %v726
    %v743 = vpack.c.b16 %v729, %v728
    %v744 = vpack.c.b16 %v731, %v730
    %v745 = vpack.c.b16 %v733, %v732
    %v746 = vpack.c.b16 %v735, %v734
    %v747 = vpack.c.b16 %v737, %v736
    %v748 = vpack.c.b16 %v739, %v738
    %v749 = vpack.c.b16 %v741, %v740
    %758 = vmatprep.subr.bf16.mxu0 0
    %759 = vmatpush1.bf16.msra.mxu0 %v749
    %760 = vmatprep.subr.bf16.mxu0 0
    %761 = vmatpush1.bf16.msra.mxu0 %v748
    %762 = vmatprep.subr.bf16.mxu0 0
    %763 = vmatpush1.bf16.msra.mxu0 %v747
    %764 = vmatprep.subr.bf16.mxu0 0
    %765 = vmatpush1.bf16.msra.mxu0 %v746
    %766 = vmatprep.subr.bf16.mxu0 0
    %767 = vmatpush1.bf16.msra.mxu0 %v745
    %768 = vmatprep.subr.bf16.mxu0 0
    %769 = vmatpush1.bf16.msra.mxu0 %v744
    %770 = vmatprep.subr.bf16.mxu0 0
    %771 = vmatpush1.bf16.msra.mxu0 %v743
    %772 = vmatprep.subr.bf16.mxu0 0
    %773 = vmatpush1.bf16.msra.mxu0 %v742
    %774 = vmatprep.subr.bf16.mxu0 0
    %775 = vmatpush2.bf16.msra.mxu0 0
    %776 = vmatprep.subr.bf16.mxu0 0
    %777 = vmatpush2.bf16.msra.mxu0 0
    %778 = vmatprep.subr.bf16.mxu0 0
    %779 = vmatpush2.bf16.msra.mxu0 0
    %780 = vmatprep.subr.bf16.mxu0 0
    %781 = vmatpush2.bf16.msra.mxu0 0
    %782 = vmatprep.subr.bf16.mxu0 0
    %783 = vmatpush2.bf16.msra.mxu0 0
    %784 = vmatprep.subr.bf16.mxu0 0
    %785 = vmatpush2.bf16.msra.mxu0 0
    %786 = vmatprep.subr.bf16.mxu0 0
    %787 = vmatpush2.bf16.msra.mxu0 0
    %788 = vmatprep.subr.bf16.mxu0 0
    %789 = vmatpush2.bf16.msra.mxu0 0
    %790 = vmatprep.mubr.bf16.mxu0 0
    %791 = vmatmul.mubr.bf16.gmra.mxu0 %v679
    %v792 = vpop.f32.mrf.mxu0
    %v793 = vadd.f32 %v708, %v792
    %v794 = vpop.f32.mrf.mxu0
    %v795 = vpop.f32.mrf.mxu0
    %v796 = vadd.f32 %v708, %v795
    %v797 = vpop.f32.mrf.mxu0
    %798 = vmatprep.mubr.bf16.mxu0 0
    %799 = vmatmul.mubr.bf16.gmra.mxu0 %v680
    %v800 = vpop.f32.mrf.mxu0
    %v801 = vadd.f32 %v708, %v800
    %v802 = vpop.f32.mrf.mxu0
    %v803 = vpop.f32.mrf.mxu0
    %v804 = vadd.f32 %v708, %v803
    %v805 = vpop.f32.mrf.mxu0
    %806 = vmatprep.mubr.bf16.mxu0 0
    %807 = vmatmul.mubr.bf16.gmra.mxu0 %v681
    %v808 = vpop.f32.mrf.mxu0
    %v809 = vadd.f32 %v708, %v808
    %v810 = vpop.f32.mrf.mxu0
    %v811 = vpop.f32.mrf.mxu0
    %v812 = vadd.f32 %v708, %v811
    %v813 = vpop.f32.mrf.mxu0
    %814 = vmatprep.mubr.bf16.mxu0 0
    %815 = vmatmul.mubr.bf16.gmra.mxu0 %v682
    %v816 = vpop.f32.mrf.mxu0
    %v817 = vadd.f32 %v708, %v816
    %v818 = vpop.f32.mrf.mxu0
    %v819 = vpop.f32.mrf.mxu0
    %v820 = vadd.f32 %v708, %v819
    %v821 = vpop.f32.mrf.mxu0
    %822 = vmatprep.mubr.bf16.mxu0 0
    %823 = vmatmul.mubr.bf16.gmra.mxu0 %v683
    %v824 = vpop.f32.mrf.mxu0
    %v825 = vadd.f32 %v708, %v824
    %v826 = vpop.f32.mrf.mxu0
    %v827 = vpop.f32.mrf.mxu0
    %v828 = vadd.f32 %v708, %v827
    %v829 = vpop.f32.mrf.mxu0
    %830 = vmatprep.mubr.bf16.mxu0 0
    %831 = vmatmul.mubr.bf16.gmra.mxu0 %v684
    %v832 = vpop.f32.mrf.mxu0
    %v833 = vadd.f32 %v708, %v832
    %v834 = vpop.f32.mrf.mxu0
    %v835 = vpop.f32.mrf.mxu0
    %v836 = vadd.f32 %v708, %v835
    %v837 = vpop.f32.mrf.mxu0
    %838 = vmatprep.mubr.bf16.mxu0 0
    %839 = vmatmul.mubr.bf16.gmra.mxu0 %v685
    %v840 = vpop.f32.mrf.mxu0
    %v841 = vadd.f32 %v708, %v840
    %v842 = vpop.f32.mrf.mxu0
    %v843 = vpop.f32.mrf.mxu0
    %v844 = vadd.f32 %v708, %v843
    %v845 = vpop.f32.mrf.mxu0
    %846 = vmatprep.mubr.bf16.mxu0 0
    %847 = vmatmul.mubr.bf16.gmra.mxu0 %v686
    %v848 = vpop.f32.mrf.mxu0
    %v849 = vadd.f32 %v708, %v848
    %v850 = vpop.f32.mrf.mxu0
    %v851 = vpop.f32.mrf.mxu0
    %v852 = vadd.f32 %v708, %v851
    %v853 = vpop.f32.mrf.mxu0
    %854 = vdwg.mxu0
    %vm855 = vcmp.gt.f32.partialorder %v793, 0.0
    %vm856 = vcmp.gt.f32.partialorder %v796, 0.0
    %vm857 = vcmp.gt.f32.partialorder %v801, 0.0
    %vm858 = vcmp.gt.f32.partialorder %v804, 0.0
    %vm859 = vcmp.gt.f32.partialorder %v809, 0.0
    %vm860 = vcmp.gt.f32.partialorder %v812, 0.0
    %vm861 = vcmp.gt.f32.partialorder %v817, 0.0
    %vm862 = vcmp.gt.f32.partialorder %v820, 0.0
    %vm863 = vcmp.gt.f32.partialorder %v825, 0.0
    %vm864 = vcmp.gt.f32.partialorder %v828, 0.0
    %vm865 = vcmp.gt.f32.partialorder %v833, 0.0
    %vm866 = vcmp.gt.f32.partialorder %v836, 0.0
    %vm867 = vcmp.gt.f32.partialorder %v841, 0.0
    %vm868 = vcmp.gt.f32.partialorder %v844, 0.0
    %vm869 = vcmp.gt.f32.partialorder %v849, 0.0
    %vm870 = vcmp.gt.f32.partialorder %v852, 0.0
    %v871 = vmul.f32 %v793, 0.01
    %v872 = vmul.f32 %v796, 0.01
    %v873 = vmul.f32 %v801, 0.01
    %v874 = vmul.f32 %v804, 0.01
    %v875 = vmul.f32 %v809, 0.01
    %v876 = vmul.f32 %v812, 0.01
    %v877 = vmul.f32 %v817, 0.01
    %v878 = vmul.f32 %v820, 0.01
    %v879 = vmul.f32 %v825, 0.01
    %v880 = vmul.f32 %v828, 0.01
    %v881 = vmul.f32 %v833, 0.01
    %v882 = vmul.f32 %v836, 0.01
    %v883 = vmul.f32 %v841, 0.01
    %v884 = vmul.f32 %v844, 0.01
    %v885 = vmul.f32 %v849, 0.01
    %v886 = vmul.f32 %v852, 0.01
    %v887 = vsel %vm855, %v793, %v871
    %v888 = vsel %vm856, %v796, %v872
    %v889 = vsel %vm857, %v801, %v873
    %v890 = vsel %vm858, %v804, %v874
    %v891 = vsel %vm859, %v809, %v875
    %v892 = vsel %vm860, %v812, %v876
    %v893 = vsel %vm861, %v817, %v877
    %v894 = vsel %vm862, %v820, %v878
    %v895 = vsel %vm863, %v825, %v879
    %v896 = vsel %vm864, %v828, %v880
    %v897 = vsel %vm865, %v833, %v881
    %v898 = vsel %vm866, %v836, %v882
    %v899 = vsel %vm867, %v841, %v883
    %v900 = vsel %vm868, %v844, %v884
    %v901 = vsel %vm869, %v849, %v885
    %v902 = vsel %vm870, %v852, %v886
    %v903 = vpack.c.bf16 %v888, %v887
    %v904 = vpack.c.bf16 %v890, %v889
    %v905 = vpack.c.bf16 %v892, %v891
    %v906 = vpack.c.bf16 %v894, %v893
    %v907 = vpack.c.bf16 %v896, %v895
    %v908 = vpack.c.bf16 %v898, %v897
    %v909 = vpack.c.bf16 %v900, %v899
    %v910 = vpack.c.bf16 %v902, %v901
    %v911 = vld [vmem:[#allocation10] sm:$0xf]
    %v912 = vld [vmem:[#allocation10 + $0x4] sm:$0xf]
    %v913 = vld [vmem:[#allocation10 + $0x8] sm:$0xf]
    %v914 = vld [vmem:[#allocation10 + $0xc] sm:$0xf]
    %v915 = vld [vmem:[#allocation10 + $0x10] sm:$0xf]
    %v916 = vld [vmem:[#allocation10 + $0x14] sm:$0xf]
    %v917 = vld [vmem:[#allocation10 + $0x18] sm:$0xf]
    %v918 = vld [vmem:[#allocation10 + $0x1c] sm:$0xf]
    %v919 = vld [vmem:[#allocation10 + $0x20] sm:$0xf]
    %v920 = vld [vmem:[#allocation10 + $0x24] sm:$0xf]
    %v921 = vld [vmem:[#allocation10 + $0x28] sm:$0xf]
    %v922 = vld [vmem:[#allocation10 + $0x2c] sm:$0xf]
    %v923 = vld [vmem:[#allocation10 + $0x30] sm:$0xf]
    %v924 = vld [vmem:[#allocation10 + $0x34] sm:$0xf]
    %v925 = vld [vmem:[#allocation10 + $0x38] sm:$0xf]
    %v926 = vld [vmem:[#allocation10 + $0x3c] sm:$0xf]
    %v927 = vld [vmem:[%s8] sm:$0x1]
    %v929 = vlaneseq
    %v930 = vshrl.u32 %v929, 7
    %v931 = vsub.s32 0, %v930
    %v932 = vrot.slane %v927, %v931
    %v950 = vunpack.c.l.b16 %v911
    %v951 = vunpack.c.l.b16 %v912
    %v952 = vunpack.c.l.b16 %v913
    %v953 = vunpack.c.l.b16 %v914
    %v954 = vunpack.c.l.b16 %v915
    %v955 = vunpack.c.l.b16 %v916
    %v956 = vunpack.c.l.b16 %v917
    %v957 = vunpack.c.l.b16 %v918
    %v958 = vunpack.c.l.b16 %v919
    %v959 = vunpack.c.l.b16 %v920
    %v960 = vunpack.c.l.b16 %v921
    %v961 = vunpack.c.l.b16 %v922
    %v962 = vunpack.c.l.b16 %v923
    %v963 = vunpack.c.l.b16 %v924
    %v964 = vunpack.c.l.b16 %v925
    %v965 = vunpack.c.l.b16 %v926
    %v966 = vpack.c.b16 %v951, %v950
    %v967 = vpack.c.b16 %v953, %v952
    %v968 = vpack.c.b16 %v955, %v954
    %v969 = vpack.c.b16 %v957, %v956
    %v970 = vpack.c.b16 %v959, %v958
    %v971 = vpack.c.b16 %v961, %v960
    %v972 = vpack.c.b16 %v963, %v962
    %v973 = vpack.c.b16 %v965, %v964
    %982 = vmatprep.subr.bf16.mxu0 0
    %983 = vmatpush1.bf16.msra.mxu0 %v973
    %984 = vmatprep.subr.bf16.mxu0 0
    %985 = vmatpush1.bf16.msra.mxu0 %v972
    %986 = vmatprep.subr.bf16.mxu0 0
    %987 = vmatpush1.bf16.msra.mxu0 %v971
    %988 = vmatprep.subr.bf16.mxu0 0
    %989 = vmatpush1.bf16.msra.mxu0 %v970
    %990 = vmatprep.subr.bf16.mxu0 0
    %991 = vmatpush1.bf16.msra.mxu0 %v969
    %992 = vmatprep.subr.bf16.mxu0 0
    %993 = vmatpush1.bf16.msra.mxu0 %v968
    %994 = vmatprep.subr.bf16.mxu0 0
    %995 = vmatpush1.bf16.msra.mxu0 %v967
    %996 = vmatprep.subr.bf16.mxu0 0
    %997 = vmatpush1.bf16.msra.mxu0 %v966
    %998 = vmatprep.subr.bf16.mxu0 0
    %999 = vmatpush2.bf16.msra.mxu0 0
    %1000 = vmatprep.subr.bf16.mxu0 0
    %1001 = vmatpush2.bf16.msra.mxu0 0
    %1002 = vmatprep.subr.bf16.mxu0 0
    %1003 = vmatpush2.bf16.msra.mxu0 0
    %1004 = vmatprep.subr.bf16.mxu0 0
    %1005 = vmatpush2.bf16.msra.mxu0 0
    %1006 = vmatprep.subr.bf16.mxu0 0
    %1007 = vmatpush2.bf16.msra.mxu0 0
    %1008 = vmatprep.subr.bf16.mxu0 0
    %1009 = vmatpush2.bf16.msra.mxu0 0
    %1010 = vmatprep.subr.bf16.mxu0 0
    %1011 = vmatpush2.bf16.msra.mxu0 0
    %1012 = vmatprep.subr.bf16.mxu0 0
    %1013 = vmatpush2.bf16.msra.mxu0 0
    %1014 = vmatprep.mubr.bf16.mxu0 0
    %1015 = vmatmul.mubr.bf16.gmra.mxu0 %v903
    %v1016 = vpop.f32.mrf.mxu0
    %v1017 = vadd.f32 %v932, %v1016
    %v1018 = vpop.f32.mrf.mxu0
    %v1019 = vpop.f32.mrf.mxu0
    %v1020 = vadd.f32 %v932, %v1019
    %v1021 = vpop.f32.mrf.mxu0
    %1022 = vmatprep.mubr.bf16.mxu0 0
    %1023 = vmatmul.mubr.bf16.gmra.mxu0 %v904
    %v1024 = vpop.f32.mrf.mxu0
    %v1025 = vadd.f32 %v932, %v1024
    %v1026 = vpop.f32.mrf.mxu0
    %v1027 = vpop.f32.mrf.mxu0
    %v1028 = vadd.f32 %v932, %v1027
    %v1029 = vpop.f32.mrf.mxu0
    %1030 = vmatprep.mubr.bf16.mxu0 0
    %1031 = vmatmul.mubr.bf16.gmra.mxu0 %v905
    %v1032 = vpop.f32.mrf.mxu0
    %v1033 = vadd.f32 %v932, %v1032
    %v1034 = vpop.f32.mrf.mxu0
    %v1035 = vpop.f32.mrf.mxu0
    %v1036 = vadd.f32 %v932, %v1035
    %v1037 = vpop.f32.mrf.mxu0
    %1038 = vmatprep.mubr.bf16.mxu0 0
    %1039 = vmatmul.mubr.bf16.gmra.mxu0 %v906
    %v1040 = vpop.f32.mrf.mxu0
    %v1041 = vadd.f32 %v932, %v1040
    %v1042 = vpop.f32.mrf.mxu0
    %v1043 = vpop.f32.mrf.mxu0
    %v1044 = vadd.f32 %v932, %v1043
    %v1045 = vpop.f32.mrf.mxu0
    %1046 = vmatprep.mubr.bf16.mxu0 0
    %1047 = vmatmul.mubr.bf16.gmra.mxu0 %v907
    %v1048 = vpop.f32.mrf.mxu0
    %v1049 = vadd.f32 %v932, %v1048
    %v1050 = vpop.f32.mrf.mxu0
    %v1051 = vpop.f32.mrf.mxu0
    %v1052 = vadd.f32 %v932, %v1051
    %v1053 = vpop.f32.mrf.mxu0
    %1054 = vmatprep.mubr.bf16.mxu0 0
    %1055 = vmatmul.mubr.bf16.gmra.mxu0 %v908
    %v1056 = vpop.f32.mrf.mxu0
    %v1057 = vadd.f32 %v932, %v1056
    %v1058 = vpop.f32.mrf.mxu0
    %v1059 = vpop.f32.mrf.mxu0
    %v1060 = vadd.f32 %v932, %v1059
    %v1061 = vpop.f32.mrf.mxu0
    %1062 = vmatprep.mubr.bf16.mxu0 0
    %1063 = vmatmul.mubr.bf16.gmra.mxu0 %v909
    %v1064 = vpop.f32.mrf.mxu0
    %v1065 = vadd.f32 %v932, %v1064
    %v1066 = vpop.f32.mrf.mxu0
    %v1067 = vpop.f32.mrf.mxu0
    %v1068 = vadd.f32 %v932, %v1067
    %v1069 = vpop.f32.mrf.mxu0
    %1070 = vmatprep.mubr.bf16.mxu0 0
    %1071 = vmatmul.mubr.bf16.gmra.mxu0 %v910
    %v1072 = vpop.f32.mrf.mxu0
    %v1073 = vadd.f32 %v932, %v1072
    %v1074 = vpop.f32.mrf.mxu0
    %v1075 = vpop.f32.mrf.mxu0
    %v1076 = vadd.f32 %v932, %v1075
    %v1077 = vpop.f32.mrf.mxu0
    %1078 = vdwg.mxu0
    %1079 = vst [vmem:[#allocation11] sm:$0xff] %v1017
    %1080 = vst [vmem:[#allocation11 + $0x8] sm:$0xff] %v1020
    %1081 = vst [vmem:[#allocation11 + $0x10] sm:$0xff] %v1025
    %1082 = vst [vmem:[#allocation11 + $0x18] sm:$0xff] %v1028
    %1083 = vst [vmem:[#allocation11 + $0x20] sm:$0xff] %v1033
    %1084 = vst [vmem:[#allocation11 + $0x28] sm:$0xff] %v1036
    %1085 = vst [vmem:[#allocation11 + $0x30] sm:$0xff] %v1041
    %1086 = vst [vmem:[#allocation11 + $0x38] sm:$0xff] %v1044
    %1087 = vst [vmem:[#allocation11 + $0x40] sm:$0xff] %v1049
    %1088 = vst [vmem:[#allocation11 + $0x48] sm:$0xff] %v1052
    %1089 = vst [vmem:[#allocation11 + $0x50] sm:$0xff] %v1057
    %1090 = vst [vmem:[#allocation11 + $0x58] sm:$0xff] %v1060
    %1091 = vst [vmem:[#allocation11 + $0x60] sm:$0xff] %v1065
    %1092 = vst [vmem:[#allocation11 + $0x68] sm:$0xff] %v1068
    %1093 = vst [vmem:[#allocation11 + $0x70] sm:$0xff] %v1073
    %1094 = vst [vmem:[#allocation11 + $0x78] sm:$0xff] %v1076
    // Predicated region
    $region58: #{tpu_custom_call.1} parent=1 // pred_check
      _
    $region59: #{tpu_custom_call.1} parent=1 // pred_check_branch
      %1096 = sbr.rel (0) target = $region61
    $region60: #{tpu_custom_call.1} parent=1 // pred_region
      %s1098 = ssub.s32 2048, 2048
      %1099 = vsyncadd [#allocation4], %s1098
      %s1100 = sshll.u32 [#allocation11], 4
      %s1101 = int_to_ptr.vmem [resolvable:$true] %s1100
      %1106 = dma.vmem_to_hbm [thread:$0]  %s1101, 2048, %s9, [#allocation4], 128, 128, 8
    $region61: #{tpu_custom_call.1} parent=1 // pred_fallthru
      _
    // Predicated region
    $region62: #{tpu_custom_call.1} parent=1 // pred_check
      _
    $region63: #{tpu_custom_call.1} parent=1 // pred_check_branch
      %1108 = sbr.rel (0) target = $region65
    $region64: #{tpu_custom_call.1} parent=1 // pred_region
      %1109 = dma.done [#allocation4], 2048
    $region65: #{tpu_custom_call.1} parent=1 // pred_fallthru
      _
    %1110 = vsyncpa [#allocation3], 1
    %1111 = vsyncpa [#allocation6], 1
    %1112 = vsyncpa [#allocation9], 1
    %1113 = vsyncpa [#allocation4], 1

</llo_original>
